<compile_context>
chip_gen: v7x
topology: tpu7x:2x2x1
jax: 0.10.0
libtpu: 0.0.40
codegen_flags: <defaults>
</compile_context>

<pallas_src>
import functools
import math

import jax
import jax.numpy as jnp
from jax.experimental import pallas as pl
from jax.experimental.pallas import tpu as pltpu

LN_EPS = 1e-12
VMEM_LIMIT = 32 * 1024 * 1024   # raise v5e's 16 MiB scoped default; no-op on v6e/v7x

# Row layout of the packed per-layer vector array (8, W).
_R_BQKV, _R_BO, _R_LN1G, _R_LN1B, _R_B1, _R_B2, _R_LN2G, _R_LN2B = range(8)


# -----------------------------------------------------------------------------
# Embedding sum + LayerNorm (fused)
# -----------------------------------------------------------------------------
def _emb_layernorm_kernel(we_ref, te_ref, pe_ref, g_ref, b_ref, o_ref, *, eps):
    x = (we_ref[0].astype(jnp.float32) + te_ref[0].astype(jnp.float32)
         + pe_ref[...].astype(jnp.float32))                    # (S, H) f32
    mean = jnp.mean(x, axis=-1, keepdims=True)
    var = jnp.mean((x - mean) ** 2, axis=-1, keepdims=True)
    y = (x - mean) * jax.lax.rsqrt(var + eps)
    o_ref[0] = (y * g_ref[...] + b_ref[...]).astype(o_ref.dtype)


def emb_layernorm(word_emb, type_emb, pos_emb, gamma, beta):
    """Fused embedding-sum + layernorm.  (B,S,H) bf16 inputs -> (B,S,H) bf16."""
    B, S, H = word_emb.shape
    return pl.pallas_call(
        functools.partial(_emb_layernorm_kernel, eps=LN_EPS),
        out_shape=jax.ShapeDtypeStruct((B, S, H), jnp.bfloat16),
        grid=(B,),
        in_specs=[
            pl.BlockSpec((1, S, H), lambda b: (b, 0, 0)),
            pl.BlockSpec((1, S, H), lambda b: (b, 0, 0)),
            pl.BlockSpec((S, H), lambda b: (0, 0)),
            pl.BlockSpec((1, H), lambda b: (0, 0)),
            pl.BlockSpec((1, H), lambda b: (0, 0)),
        ],
        out_specs=pl.BlockSpec((1, S, H), lambda b: (b, 0, 0)),
        compiler_params=pltpu.CompilerParams(
            dimension_semantics=("parallel",), vmem_limit_bytes=VMEM_LIMIT),
        cost_estimate=pl.CostEstimate(flops=int(10 * B * S * H),
                                      transcendentals=0,
                                      bytes_accessed=int(8 * B * S * H)),
    )(word_emb, type_emb, pos_emb, gamma, beta)


# -----------------------------------------------------------------------------
# Fused transformer encoder layer
# -----------------------------------------------------------------------------
def _encoder_layer_kernel(x_ref, bias_ref, wqkv_ref, wo_ref, w1_ref, w2_ref,
                          vecs_ref, o_ref, qkv_ref, ctx_ref,
                          *, num_heads, head_dim, seqs, seq_len, inter, eps):
    H = num_heads * head_dim
    M = seqs * seq_len
    x_bf = x_ref[...].reshape(M, H)                            # (M, H) bf16

    # ---- fused QKV projection.  1/sqrt(hd) is already folded into the Q columns
    # of wqkv/bqkv at init; bias is added and the result downcast to bf16 ONCE,
    # staged to VMEM scratch so the f32 (M,3H) intermediate never stays live in
    # vregs across the head loop.
    qkv = jnp.dot(x_bf, wqkv_ref[...], preferred_element_type=jnp.float32)
    qkv_ref[...] = (qkv + vecs_ref[_R_BQKV:_R_BQKV + 1, :3 * H]).astype(jnp.bfloat16)

    # ---- attention.  Per-sequence / per-head score+softmax+PV; the per-head
    # context goes straight into VMEM scratch (no cross-iteration vreg accumulator),
    # and the W_O projection is done afterwards as ONE (M,H)x(H,H) MXU pass instead
    # of num_heads K=head_dim matmuls.
    for rb in range(seqs):
        r0 = rb * seq_len
        bias = bias_ref[rb]                                    # (1, S) f32 additive mask
        for h in range(num_heads):
            lo = h * head_dim
            q = qkv_ref[pl.ds(r0, seq_len), pl.ds(lo, head_dim)]
            k = qkv_ref[pl.ds(r0, seq_len), pl.ds(H + lo, head_dim)]
            v = qkv_ref[pl.ds(r0, seq_len), pl.ds(2 * H + lo, head_dim)]
            s = jax.lax.dot_general(q, k, (((1,), (1,)), ((), ())),
                                    preferred_element_type=jnp.float32) + bias
            m = jnp.max(s, axis=-1, keepdims=True)             # f32 softmax stats
            p = jnp.exp(s - m)
            denom = jnp.sum(p, axis=-1, keepdims=True)
            p = p * pl.reciprocal(denom, approx=True)          # EUP slot, not VPU divide
            ctx = jnp.dot(p.astype(jnp.bfloat16), v,
                          preferred_element_type=jnp.float32)  # (S, hd)
            ctx_ref[pl.ds(r0, seq_len), pl.ds(lo, head_dim)] = ctx.astype(jnp.bfloat16)

    attn = jnp.dot(ctx_ref[...], wo_ref[...], preferred_element_type=jnp.float32)
    attn = attn + vecs_ref[_R_BO:_R_BO + 1, :H]

    # ---- residual + LN1 (f32 stats) ----
    x1 = x_bf.astype(jnp.float32) + attn
    mean1 = jnp.mean(x1, axis=-1, keepdims=True)
    var1 = jnp.mean((x1 - mean1) ** 2, axis=-1, keepdims=True)
    y1 = ((x1 - mean1) * jax.lax.rsqrt(var1 + eps)
          * vecs_ref[_R_LN1G:_R_LN1G + 1, :H] + vecs_ref[_R_LN1B:_R_LN1B + 1, :H])

    # ---- FFN ----
    # TODO(synk): HF ELECTRA uses exact (erf) GELU; tanh approximation used here.
    h1 = jnp.dot(y1.astype(jnp.bfloat16), w1_ref[...],
                 preferred_element_type=jnp.float32) + vecs_ref[_R_B1:_R_B1 + 1, :inter]
    h1 = jax.nn.gelu(h1, approximate=True)
    ffn = jnp.dot(h1.astype(jnp.bfloat16), w2_ref[...],
                  preferred_element_type=jnp.float32) + vecs_ref[_R_B2:_R_B2 + 1, :H]

    # ---- residual + LN2 ----
    x2 = y1 + ffn
    mean2 = jnp.mean(x2, axis=-1, keepdims=True)
    var2 = jnp.mean((x2 - mean2) ** 2, axis=-1, keepdims=True)
    y2 = ((x2 - mean2) * jax.lax.rsqrt(var2 + eps)
          * vecs_ref[_R_LN2G:_R_LN2G + 1, :H] + vecs_ref[_R_LN2B:_R_LN2B + 1, :H])
    o_ref[...] = y2.astype(o_ref.dtype).reshape(seqs, seq_len, H)


def encoder_layer(x, bias, lp, num_heads, head_dim, seqs_per_block):
    """One fused transformer encoder layer.  x: (B,S,H) bf16, bias: (B,1,S) f32."""
    B, S, H = x.shape
    I = lp["w1"].shape[1]
    rb = seqs_per_block
    nb = B // rb
    W = lp["vecs"].shape[1]

    def wspec(shape):
        # Constant-index weights: block index never changes across the grid, so
        # Pallas fetches them into VMEM once and does not re-DMA per step.
        # TODO(synk): at real ELECTRA sizes on v7x (64 MiB VMEM), mark these
        # pipeline_mode=pl.Buffered(1) and tile the FFN weights.
        return pl.BlockSpec(shape, lambda b: (0, 0))

    flops = B * (2 * S * H * 3 * H + 4 * num_heads * S * S * head_dim
                 + 2 * S * H * H + 4 * S * H * I)
    bytes_acc = (4 * B * S * H + 4 * B * S
                 + 2 * (3 * H * H + H * H + 2 * H * I) + 4 * 8 * W)

    return pl.pallas_call(
        functools.partial(_encoder_layer_kernel, num_heads=num_heads,
                          head_dim=head_dim, seqs=rb, seq_len=S, inter=I,
                          eps=LN_EPS),
        out_shape=jax.ShapeDtypeStruct((B, S, H), jnp.bfloat16),
        grid=(nb,),
        in_specs=[
            pl.BlockSpec((rb, S, H), lambda b: (b, 0, 0)),     # x (2 seqs / step)
            pl.BlockSpec((rb, 1, S), lambda b: (b, 0, 0)),     # additive attn bias
            wspec((H, 3 * H)),                                 # fused QKV weight
            wspec((H, H)),                                     # attn output proj
            wspec((H, I)),                                     # FFN up
            wspec((I, H)),                                     # FFN down
            wspec((8, W)),                                     # packed biases / LN vecs
        ],
        out_specs=pl.BlockSpec((rb, S, H), lambda b: (b, 0, 0)),
        scratch_shapes=[
            pltpu.VMEM((rb * S, 3 * H), jnp.bfloat16),         # qkv staging
            pltpu.VMEM((rb * S, H), jnp.bfloat16),             # per-head ctx staging
        ],
        compiler_params=pltpu.CompilerParams(
            dimension_semantics=("parallel",), vmem_limit_bytes=VMEM_LIMIT),
        cost_estimate=pl.CostEstimate(
            flops=int(flops),
            transcendentals=int(B * (num_heads * S * S + S * I)),
            bytes_accessed=int(bytes_acc)),
    )(x, bias, lp["wqkv"], lp["wo"], lp["w1"], lp["w2"], lp["vecs"])


# -----------------------------------------------------------------------------
# Generator MLM head (dense + gelu + LN + vocab projection), vocab-tiled
# -----------------------------------------------------------------------------
def _gen_head_kernel(x_ref, wd_ref, bd_ref, g_ref, b_ref, wv_ref, bv_ref, o_ref,
                     y_ref, *, seqs, seq_len, eps):
    M = seqs * seq_len

    # dense + gelu + LN is vocab-independent: compute once per batch block (first
    # vocab tile) and keep resident in VMEM scratch across the vocab-tile axis.
    @pl.when(pl.program_id(1) == 0)
    def _():
        x = x_ref[...].reshape(M, -1)
        h = jnp.dot(x, wd_ref[...], preferred_element_type=jnp.float32) + bd_ref[...]
        h = jax.nn.gelu(h, approximate=True)
        mean = jnp.mean(h, axis=-1, keepdims=True)
        var = jnp.mean((h - mean) ** 2, axis=-1, keepdims=True)
        y = (h - mean) * jax.lax.rsqrt(var + eps) * g_ref[...] + b_ref[...]
        y_ref[...] = y.astype(jnp.bfloat16)

    logits = jnp.dot(y_ref[...], wv_ref[...], preferred_element_type=jnp.float32)
    tv = logits.shape[-1]
    o_ref[...] = (logits + bv_ref[...]).reshape(seqs, seq_len, tv)


def generator_head(x, params, seqs_per_block, vocab_tile=128):
    """Fused MLM head, tiled over vocab.  -> (B, S, V) f32."""
    B, S, H = x.shape
    V = params["vocab_w"].shape[1]
    rb = seqs_per_block
    nb = B // rb
    tV = vocab_tile if V % vocab_tile == 0 else V
    nv = V // tV

    def wspec(shape):
        return pl.BlockSpec(shape, lambda b, v: (0, 0))

    return pl.pallas_call(
        functools.partial(_gen_head_kernel, seqs=rb, seq_len=S, eps=LN_EPS),
        out_shape=jax.ShapeDtypeStruct((B, S, V), jnp.float32),
        grid=(nb, nv),
        in_specs=[
            pl.BlockSpec((rb, S, H), lambda b, v: (b, 0, 0)),
            wspec((H, H)), wspec((1, H)),
            wspec((1, H)), wspec((1, H)),
            pl.BlockSpec((H, tV), lambda b, v: (0, v)),        # vocab weight tile
            pl.BlockSpec((1, tV), lambda b, v: (0, v)),        # vocab bias tile
        ],
        out_specs=pl.BlockSpec((rb, S, tV), lambda b, v: (b, 0, v)),
        scratch_shapes=[pltpu.VMEM((rb * S, H), jnp.bfloat16)],
        compiler_params=pltpu.CompilerParams(
            dimension_semantics=("parallel", "arbitrary"),
            vmem_limit_bytes=VMEM_LIMIT),
        cost_estimate=pl.CostEstimate(
            flops=int(B * (2 * S * H * H + 2 * S * H * V)),
            transcendentals=int(B * S * H),
            bytes_accessed=int(2 * B * S * H + 4 * B * S * V + 2 * (H * H + H * V))),
    )(x, params["head_dense_w"], params["head_dense_b"],
      params["head_ln_g"], params["head_ln_b"],
      params["vocab_w"], params["vocab_b"])


# -----------------------------------------------------------------------------
# Discriminator RTD head (dense + gelu + scalar projection)
# -----------------------------------------------------------------------------
def _disc_head_kernel(x_ref, wd_ref, bd_ref, wout_ref, bout_ref, o_ref,
                      *, seqs, seq_len):
    M = seqs * seq_len
    x = x_ref[...].reshape(M, -1)
    h = jnp.dot(x, wd_ref[...], preferred_element_type=jnp.float32) + bd_ref[...]
    h = jax.nn.gelu(h, approximate=True)
    # (1, H) contracted with (M, H) -> (1, M): lane-dense store, no (M,1) launch.
    logits = jax.lax.dot_general(wout_ref[...], h.astype(jnp.bfloat16),
                                 (((1,), (1,)), ((), ())),
                                 preferred_element_type=jnp.float32)
    o_ref[0] = logits + bout_ref[...]


def discriminator_head(x, params, seqs_per_block):
    """Fused RTD head: dense + gelu + scalar projection.  -> (B, S) f32."""
    B, S, H = x.shape
    rb = seqs_per_block
    nb = B // rb

    def wspec(shape):
        return pl.BlockSpec(shape, lambda b: (0, 0))

    out = pl.pallas_call(
        functools.partial(_disc_head_kernel, seqs=rb, seq_len=S),
        out_shape=jax.ShapeDtypeStruct((nb, 1, rb * S), jnp.float32),
        grid=(nb,),
        in_specs=[
            pl.BlockSpec((rb, S, H), lambda b: (b, 0, 0)),
            wspec((H, H)), wspec((1, H)),
            wspec((1, H)), wspec((1, 1)),
        ],
        out_specs=pl.BlockSpec((1, 1, rb * S), lambda b: (b, 0, 0)),
        compiler_params=pltpu.CompilerParams(
            dimension_semantics=("parallel",), vmem_limit_bytes=VMEM_LIMIT),
        cost_estimate=pl.CostEstimate(
            flops=int(B * (2 * S * H * H + 2 * S * H)),
            transcendentals=int(B * S * H),
            bytes_accessed=int(2 * B * S * H + 4 * B * S + 2 * H * H)),
    )(x, params["head_dense_w"], params["head_dense_b"],
      params["head_out_w"], params["head_out_b"])
    return out.reshape(B, S)


# -----------------------------------------------------------------------------
# Synthetic ELECTRA-style encoder (generator / discriminator) built on kernels
# -----------------------------------------------------------------------------
def _dense_init(key, fan_in, fan_out):
    return (0.02 * jax.random.normal(key, (fan_in, fan_out), jnp.float32)
            ).astype(jnp.bfloat16)


def init_model(key, vocab, hidden, heads, inter, layers, max_pos, type_vocab,
               is_generator):
    head_dim = hidden // heads
    scale = 1.0 / math.sqrt(head_dim)
    keys = jax.random.split(key, 6 + layers)
    params = {
        "word_emb": (0.02 * jax.random.normal(keys[0], (vocab, hidden))
                     ).astype(jnp.bfloat16),
        "pos_emb": (0.02 * jax.random.normal(keys[1], (max_pos, hidden))
                    ).astype(jnp.bfloat16),
        "type_emb": (0.02 * jax.random.normal(keys[2], (type_vocab, hidden))
                     ).astype(jnp.bfloat16),
        "emb_ln_g": jnp.ones((1, hidden), jnp.float32),
        "emb_ln_b": jnp.zeros((1, hidden), jnp.float32),
        "layers": [],
        "num_heads": heads,
    }
    W = ((max(3 * hidden, inter) + 127) // 128) * 128
    for l in range(layers):
        lk = jax.random.split(keys[3 + l], 4)
        wqkv = 0.02 * jax.random.normal(lk[0], (hidden, 3 * hidden), jnp.float32)
        # Fold 1/sqrt(head_dim) into the Q projection (columns 0:H) and its bias.
        wqkv = wqkv.at[:, :hidden].multiply(scale)
        bqkv = jnp.zeros((3 * hidden,), jnp.float32).at[:hidden].multiply(scale)
        # Pack all small per-layer vectors into one lane-dense (8, W) array.
        vecs = jnp.zeros((8, W), jnp.float32)
        vecs = vecs.at[_R_BQKV, :3 * hidden].set(bqkv)
        vecs = vecs.at[_R_BO, :hidden].set(jnp.zeros((hidden,), jnp.float32))
        vecs = vecs.at[_R_LN1G, :hidden].set(jnp.ones((hidden,), jnp.float32))
        vecs = vecs.at[_R_LN1B, :hidden].set(jnp.zeros((hidden,), jnp.float32))
        vecs = vecs.at[_R_B1, :inter].set(jnp.zeros((inter,), jnp.float32))
        vecs = vecs.at[_R_B2, :hidden].set(jnp.zeros((hidden,), jnp.float32))
        vecs = vecs.at[_R_LN2G, :hidden].set(jnp.ones((hidden,), jnp.float32))
        vecs = vecs.at[_R_LN2B, :hidden].set(jnp.zeros((hidden,), jnp.float32))
        params["layers"].append({
            "wqkv": wqkv.astype(jnp.bfloat16),
            "wo": _dense_init(lk[1], hidden, hidden),
            "w1": _dense_init(lk[2], hidden, inter),
            "w2": _dense_init(lk[3], inter, hidden),
            "vecs": vecs,
        })
    hk = jax.random.split(keys[3 + layers], 2)
    params["head_dense_w"] = _dense_init(hk[0], hidden, hidden)
    params["head_dense_b"] = jnp.zeros((1, hidden), jnp.float32)
    if is_generator:
        params["head_ln_g"] = jnp.ones((1, hidden), jnp.float32)
        params["head_ln_b"] = jnp.zeros((1, hidden), jnp.float32)
        params["vocab_w"] = _dense_init(hk[1], hidden, vocab)
        params["vocab_b"] = jnp.zeros((1, vocab), jnp.float32)
    else:
        params["head_out_w"] = _dense_init(hk[1], 1, hidden)  # stored as (1, H) row
        params["head_out_b"] = jnp.zeros((1, 1), jnp.float32)
    return params


def encoder_forward(params, input_ids, attention_mask, token_type_ids,
                    seqs_per_block):
    B, S = input_ids.shape
    H = params["word_emb"].shape[1]
    nh = params["num_heads"]
    hd = H // nh

    # Embedding gathers are data-dependent -> plain JAX glue; the sum + LN is one
    # fused kernel (no f32 (B,S,H) HBM round trip).
    we = jnp.take(params["word_emb"], input_ids, axis=0)       # (B,S,H) bf16
    te = jnp.take(params["type_emb"], token_type_ids, axis=0)  # (B,S,H) bf16
    pe = params["pos_emb"][:S]                                 # (S,H) bf16
    x = emb_layernorm(we, te, pe, params["emb_ln_g"], params["emb_ln_b"])

    # Additive attention bias, kept as (B, 1, S); routed per batch via BlockSpec.
    bias = ((1.0 - attention_mask.astype(jnp.float32)) * -10000.0).reshape(B, 1, S)

    for lp in params["layers"]:
        x = encoder_layer(x, bias, lp, nh, hd, seqs_per_block)
    return x                                                   # (B, S, H) bf16


def generator_forward(params, ids, mask, tt, seqs_per_block):
    x = encoder_forward(params, ids, mask, tt, seqs_per_block)
    return generator_head(x, params, seqs_per_block)           # (B, S, V) f32


def discriminator_forward(params, ids, mask, tt, seqs_per_block):
    x = encoder_forward(params, ids, mask, tt, seqs_per_block)
    return discriminator_head(x, params, seqs_per_block)       # (B, S) f32


# -----------------------------------------------------------------------------
# ELECTRAModel.forward equivalent
# -----------------------------------------------------------------------------
def electra_forward(gen_params, disc_params, masked_inputs, is_mlm_applied,
                    labels, attention_mask, token_type_ids, sample_key):
    B = masked_inputs.shape[0]
    # Pack 2 sequences per grid step (M = 2S) to fill v6e/v7x's 256-wide MXU.
    sb = 2 if B % 2 == 0 else 1

    gen_logits = generator_forward(gen_params, masked_inputs, attention_mask,
                                   token_type_ids, sb)         # (B, S, V)

    # mlm_gen_logits = gen_logits[is_mlm_applied, :] — data-dependent output shape,
    # so this stays un-jitted glue (matches the PyTorch boolean-mask gather).
    mlm_gen_logits = gen_logits[is_mlm_applied]                # (n_mask, V)

    # torch.no_grad(): multinomial over softmax == categorical over logits.
    sampled = jax.random.categorical(sample_key, gen_logits, axis=-1)
    sampled = sampled.astype(masked_inputs.dtype)
    generated = jnp.where(is_mlm_applied, sampled, masked_inputs)
    is_replaced = is_mlm_applied & (sampled != labels)

    disc_logits = discriminator_forward(disc_params, generated, attention_mask,
                                        token_type_ids, sb)    # (B, S)
    return (mlm_gen_logits, generated, disc_logits, is_replaced,
            attention_mask, is_mlm_applied)


# -----------------------------------------------------------------------------
if __name__ == "__main__":
    B, S, V = 4, 128, 256        # lane-dense sizes (multiples of 128 on lane axes)
    key = jax.random.PRNGKey(0)
    k_gen, k_disc, k_ids, k_mask, k_lab, k_sample = jax.random.split(key, 6)

    # Generator is smaller than the discriminator (standard ELECTRA setup).
    gen_params = init_model(k_gen, vocab=V, hidden=128, heads=2, inter=256,
                            layers=2, max_pos=S, type_vocab=2, is_generator=True)
    disc_params = init_model(k_disc, vocab=V, hidden=128, heads=4, inter=256,
                             layers=2, max_pos=S, type_vocab=2, is_generator=False)

    masked_inputs = jax.random.randint(k_ids, (B, S), 0, V, dtype=jnp.int32)
    is_mlm_applied = jax.random.uniform(k_mask, (B, S)) < 0.25
    rand_labels = jax.random.randint(k_lab, (B, S), 0, V, dtype=jnp.int32)
    labels = jnp.where(is_mlm_applied, rand_labels, jnp.int32(-100))
    attention_mask = jnp.ones((B, S), jnp.int32).at[:, S - 2:].set(0)
    token_type_ids = jnp.zeros((B, S), jnp.int32)

    outs = electra_forward(gen_params, disc_params, masked_inputs, is_mlm_applied,
                           labels, attention_mask, token_type_ids, k_sample)
    jax.block_until_ready(outs)

    mlm_gen_logits, generated, disc_logits, is_replaced, am, mlm = outs
    assert generated.shape == (B, S) and disc_logits.shape == (B, S)
    assert mlm_gen_logits.shape[-1] == V and is_replaced.shape == (B, S)
    assert bool(jnp.all(jnp.isfinite(disc_logits)))
    assert bool(jnp.all(jnp.isfinite(mlm_gen_logits)))
    print("KERNEL_OK")
</pallas_src>

<mosaic_0001>
module attributes {stable_mosaic.version = 11 : i64} {
  func.func @_emb_layernorm_kernel(%arg0: i32, %arg1: memref<1x128x128xbf16, #tpu.memory_space<vmem>>, %arg2: memref<1x128x128xbf16, #tpu.memory_space<vmem>>, %arg3: memref<128x128xbf16, #tpu.memory_space<vmem>>, %arg4: memref<1x128xf32, #tpu.memory_space<vmem>>, %arg5: memref<1x128xf32, #tpu.memory_space<vmem>>, %arg6: memref<1x128x128xbf16, #tpu.memory_space<vmem>>) attributes {dimension_semantics = [#tpu.dimension_semantics<parallel>], iteration_bounds = array<i64: 4>, scalar_prefetch = 0 : i64, scratch_operands = 0 : i64, tpu.core_type = #tpu.core_type<tc>, window_params = [{transform_indices = @transform_0, window_bounds = array<i64: 1, 128, 128>}, {transform_indices = @transform_1, window_bounds = array<i64: 1, 128, 128>}, {pipeline_mode = #tpu.pipeline_mode<synchronous>, transform_indices = @transform_2, window_bounds = array<i64: 128, 128>}, {pipeline_mode = #tpu.pipeline_mode<synchronous>, transform_indices = @transform_3, window_bounds = array<i64: 1, 128>}, {pipeline_mode = #tpu.pipeline_mode<synchronous>, transform_indices = @transform_4, window_bounds = array<i64: 1, 128>}, {transform_indices = @transform_5, window_bounds = array<i64: 1, 128, 128>}]} {
    %c0 = arith.constant 0 : index
    %c0_0 = arith.constant 0 : index
    %c0_1 = arith.constant 0 : index
    %0 = vector.load %arg1[%c0, %c0_0, %c0_1] : memref<1x128x128xbf16, #tpu.memory_space<vmem>>, vector<1x128x128xbf16>
    %1 = vector.shape_cast %0 : vector<1x128x128xbf16> to vector<128x128xbf16>
    %2 = arith.extf %1 : vector<128x128xbf16> to vector<128x128xf32>
    %c0_2 = arith.constant 0 : index
    %c0_3 = arith.constant 0 : index
    %c0_4 = arith.constant 0 : index
    %3 = vector.load %arg2[%c0_2, %c0_3, %c0_4] : memref<1x128x128xbf16, #tpu.memory_space<vmem>>, vector<1x128x128xbf16>
    %4 = vector.shape_cast %3 : vector<1x128x128xbf16> to vector<128x128xbf16>
    %5 = arith.extf %4 : vector<128x128xbf16> to vector<128x128xf32>
    %6 = arith.addf %2, %5 : vector<128x128xf32>
    %c0_5 = arith.constant 0 : index
    %c0_6 = arith.constant 0 : index
    %7 = vector.load %arg3[%c0_5, %c0_6] : memref<128x128xbf16, #tpu.memory_space<vmem>>, vector<128x128xbf16>
    %8 = arith.extf %7 : vector<128x128xbf16> to vector<128x128xf32>
    %9 = arith.addf %6, %8 : vector<128x128xf32>
    %cst = arith.constant dense<0.000000e+00> : vector<128xf32>
    %10 = vector.multi_reduction <add>, %9, %cst [1] : vector<128x128xf32> to vector<128xf32>
    %11 = vector.shape_cast %10 : vector<128xf32> to vector<128x1xf32>
    %cst_7 = arith.constant 1.280000e+02 : f32
    %12 = vector.broadcast %cst_7 : f32 to vector<128x1xf32>
    %13 = arith.divf %11, %12 : vector<128x1xf32>
    %14 = vector.broadcast %13 : vector<128x1xf32> to vector<128x128xf32>
    %15 = arith.subf %9, %14 : vector<128x128xf32>
    %16 = arith.mulf %15, %15 : vector<128x128xf32>
    %cst_8 = arith.constant dense<0.000000e+00> : vector<128xf32>
    %17 = vector.multi_reduction <add>, %16, %cst_8 [1] : vector<128x128xf32> to vector<128xf32>
    %18 = vector.shape_cast %17 : vector<128xf32> to vector<128x1xf32>
    %cst_9 = arith.constant 1.280000e+02 : f32
    %19 = vector.broadcast %cst_9 : f32 to vector<128x1xf32>
    %20 = arith.divf %18, %19 : vector<128x1xf32>
    %21 = vector.broadcast %13 : vector<128x1xf32> to vector<128x128xf32>
    %22 = arith.subf %9, %21 : vector<128x128xf32>
    %cst_10 = arith.constant 9.99999996E-13 : f32
    %23 = vector.broadcast %cst_10 : f32 to vector<128x1xf32>
    %24 = arith.addf %20, %23 : vector<128x1xf32>
    %25 = math.rsqrt %24 : vector<128x1xf32>
    %26 = vector.broadcast %25 : vector<128x1xf32> to vector<128x128xf32>
    %27 = arith.mulf %22, %26 : vector<128x128xf32>
    %c0_11 = arith.constant 0 : index
    %c0_12 = arith.constant 0 : index
    %28 = vector.load %arg4[%c0_11, %c0_12] : memref<1x128xf32, #tpu.memory_space<vmem>>, vector<1x128xf32>
    %29 = vector.broadcast %28 : vector<1x128xf32> to vector<128x128xf32>
    %30 = arith.mulf %27, %29 : vector<128x128xf32>
    %c0_13 = arith.constant 0 : index
    %c0_14 = arith.constant 0 : index
    %31 = vector.load %arg5[%c0_13, %c0_14] : memref<1x128xf32, #tpu.memory_space<vmem>>, vector<1x128xf32>
    %32 = vector.broadcast %31 : vector<1x128xf32> to vector<128x128xf32>
    %33 = arith.addf %30, %32 : vector<128x128xf32>
    %34 = arith.truncf %33 : vector<128x128xf32> to vector<128x128xbf16>
    %c0_15 = arith.constant 0 : index
    %c0_16 = arith.constant 0 : index
    %c0_17 = arith.constant 0 : index
    %35 = vector.load %arg6[%c0_15, %c0_16, %c0_17] : memref<1x128x128xbf16, #tpu.memory_space<vmem>>, vector<1x128x128xbf16>
    %36 = vector.shape_cast %35 : vector<1x128x128xbf16> to vector<128x128xbf16>
    %37 = vector.shape_cast %34 : vector<128x128xbf16> to vector<1x128x128xbf16>
    tpu.vector_store %arg6[%c0_15, %c0_16, %c0_17], %37 {strides = array<i32>} : memref<1x128x128xbf16, #tpu.memory_space<vmem>>, vector<1x128x128xbf16>,
    return
  }
  func.func @transform_0(%arg0: i32) -> (i32, i32, i32) {
    %c0_i32 = arith.constant 0 : i32
    %c0_i32_0 = arith.constant 0 : i32
    %c0_i32_1 = arith.constant 0 : i32
    return %arg0, %c0_i32, %c0_i32_0 : i32, i32, i32
  }
  func.func @transform_1(%arg0: i32) -> (i32, i32, i32) {
    %c0_i32 = arith.constant 0 : i32
    %c0_i32_0 = arith.constant 0 : i32
    %c0_i32_1 = arith.constant 0 : i32
    return %arg0, %c0_i32, %c0_i32_0 : i32, i32, i32
  }
  func.func @transform_2(%arg0: i32) -> (i32, i32) {
    %c0_i32 = arith.constant 0 : i32
    %c0_i32_0 = arith.constant 0 : i32
    %c0_i32_1 = arith.constant 0 : i32
    return %c0_i32, %c0_i32_0 : i32, i32
  }
  func.func @transform_3(%arg0: i32) -> (i32, i32) {
    %c0_i32 = arith.constant 0 : i32
    %c0_i32_0 = arith.constant 0 : i32
    %c0_i32_1 = arith.constant 0 : i32
    return %c0_i32, %c0_i32_0 : i32, i32
  }
  func.func @transform_4(%arg0: i32) -> (i32, i32) {
    %c0_i32 = arith.constant 0 : i32
    %c0_i32_0 = arith.constant 0 : i32
    %c0_i32_1 = arith.constant 0 : i32
    return %c0_i32, %c0_i32_0 : i32, i32
  }
  func.func @transform_5(%arg0: i32) -> (i32, i32, i32) {
    %c0_i32 = arith.constant 0 : i32
    %c0_i32_0 = arith.constant 0 : i32
    %c0_i32_1 = arith.constant 0 : i32
    return %arg0, %c0_i32, %c0_i32_0 : i32, i32, i32
  }
}

</mosaic_0001>

<llo_original>
// kernel: tpu_custom_call.1
$region0: #{tpu_custom_call.1}
  #allocation0 [shape = 'u32[]', space=smem, size = 0x4, offset = 0x4, fixed_abs, tag = 'smem constant byte address 0x4 - core index']
  #allocation1 [shape = 'u32[144,128]{1,0:T(1,128)}', space=vmem, size = 0x12000, scoped, tag = 'internal scratch']
  %s0 = inlined_call_operand.hbm [shape: bf16[4,128,128], index: 0, kind: input, shape index: {}]
  %s1 = inlined_call_operand.hbm [shape: bf16[4,128,128], index: 1, kind: input, shape index: {}]
  %s2 = inlined_call_operand.hbm [shape: bf16[128,128], index: 2, kind: input, shape index: {}]
  %s3 = inlined_call_operand.vmem [shape: f32[1,128], index: 3, kind: input, shape index: {}]
  %s4 = inlined_call_operand.vmem [shape: f32[1,128], index: 4, kind: input, shape index: {}]
  %s5 = inlined_call_operand.hbm [shape: bf16[4,128,128], index: 5, kind: output, shape index: {}]
  %s6 = sld [smem:[#allocation0]]
  $region65: #{tpu_custom_call.1} parent=0
    _
  %s8 = ssub.s32 1, %s6
  %s9 = scalar_select 0, %s8, %s6
  $region1: #{tpu_custom_call.1} parent=0
    #allocation2 [shape = 'u8[65536]{0}', space=vmem, size = 0x10000, scoped, tag = 'input window, operand 0']
    #allocation3 [shape = 's32[2]{0}', space=sflag, size = 0x8, scoped, tag = 'scoped memory for tpu_custom_call.1']
    #allocation4 [shape = 's32[2]{0}', space=sflag, size = 0x8, scoped, tag = 'scoped memory for tpu_custom_call.1']
    #allocation5 [shape = 'u8[65536]{0}', space=vmem, size = 0x10000, scoped, tag = 'input window, operand 1']
    #allocation6 [shape = 's32[2]{0}', space=sflag, size = 0x8, scoped, tag = 'scoped memory for tpu_custom_call.1']
    #allocation7 [shape = 'u8[32768]{0}', space=vmem, size = 0x8000, scoped, tag = 'input window, operand 2, single buffered']
    #allocation8 [shape = 'u8[65536]{0}', space=vmem, size = 0x10000, scoped, tag = 'output window, operand 0']
    %10 = vsyncpa [#allocation3], 0
    %s11 = scalar_lea.sflag [#allocation3], 1
    %12 = vsyncpa %s11, 0
    %13 = vsyncpa [#allocation6], 0
    %s14 = scalar_lea.sflag [#allocation6], 1
    %15 = vsyncpa %s14, 0
    %16 = vsyncpa [#allocation4], 0
    %s17 = scalar_lea.sflag [#allocation4], 1
    %18 = vsyncpa %s17, 0
    loop: start=0, step=1, limit=6
    $region2: #{tpu_custom_call.1} parent=1 // loop_pre_header
      _
    $region3: #{tpu_custom_call.1} parent=1 // loop_header
      %s20 = sphi 0, %s24
      %p21 = scmp.ge.s32.totalorder %s20, 6
      %s30 = sphi 0, %s32
      %s33 = sphi 0, %s30
      %s34 = sphi 0, %s33
      %s50 = sphi 0, %s34
      %s56 = sphi 0, %s58
      %s59 = sphi 0, %s56
      %s60 = sphi 0, %s59
      %s76 = sphi 0, %s60
      %s80 = sphi 0, %s80
      %s82 = sphi 0, %s80
      %s83 = sphi 0, %s82
      %s97 = sphi 0, %s83
      %s101 = sphi 0, %s101
      %s103 = sphi 0, %s101
      %s104 = sphi 0, %s103
      %s118 = sphi 0, %s104
      %s122 = sphi 0, %s122
      %s124 = sphi 0, %s122
      %s125 = sphi 0, %s124
      %s139 = sphi 0, %s125
      %s145 = sphi 0, %s147
      %s148 = sphi 0, %s145
      %s149 = sphi 0, %s148
      %s165 = sphi 0, %s149
    $region4: #{tpu_custom_call.1} parent=1 // loop_header_branch
      %23 = sbr.rel (%p21) target = $region8
    $region5: #{tpu_custom_call.1} parent=1 // loop_body
      %s25 = ssub.s32 %s20, 1
      %s26 = ssub.s32 %s20, 2
      %s27 = sadd.s32 %s20, 1
      %s28 = ssub.s32 %s20, %s27
      %p29 = scmp.eq.s32.totalorder %s28, 0
      %s31 = sadd.s32 %s30, 1
      %s32 = scalar_select %p29, %s30, %s31
      %p35 = pneg %p29
      %p36 = scmp.eq.s32.totalorder %s20, 3
      %p37 = por %p35, %p36
      %p38 = scmp.ne.s32.totalorder %s30, %s33
      %p39 = scmp.eq.s32.totalorder %s20, 0
      %p40 = por %p38, %p39
      %p41 = scmp.ne.s32.totalorder %s30, %s33
      %p42 = scmp.eq.s32.totalorder %s25, 3
      %p43 = por %p41, %p42
      %p44 = scmp.ne.s32.totalorder %s33, %s34
      %p45 = scmp.eq.s32.totalorder %s25, 0
      %p46 = por %p44, %p45
      %p47 = scmp.ne.s32.totalorder %s33, %s34
      %p48 = scmp.eq.s32.totalorder %s26, 3
      %p49 = por %p47, %p48
      %p51 = scmp.ne.s32.totalorder %s34, %s50
      %p52 = scmp.eq.s32.totalorder %s26, 0
      %p53 = por %p51, %p52
      %s54 = ssub.s32 %s20, %s27
      %p55 = scmp.eq.s32.totalorder %s54, 0
      %s57 = sadd.s32 %s56, 1
      %s58 = scalar_select %p55, %s56, %s57
      %p61 = pneg %p55
      %p62 = scmp.eq.s32.totalorder %s20, 3
      %p63 = por %p61, %p62
      %p64 = scmp.ne.s32.totalorder %s56, %s59
      %p65 = scmp.eq.s32.totalorder %s20, 0
      %p66 = por %p64, %p65
      %p67 = scmp.ne.s32.totalorder %s56, %s59
      %p68 = scmp.eq.s32.totalorder %s25, 3
      %p69 = por %p67, %p68
      %p70 = scmp.ne.s32.totalorder %s59, %s60
      %p71 = scmp.eq.s32.totalorder %s25, 0
      %p72 = por %p70, %p71
      %p73 = scmp.ne.s32.totalorder %s59, %s60
      %p74 = scmp.eq.s32.totalorder %s26, 3
      %p75 = por %p73, %p74
      %p77 = scmp.ne.s32.totalorder %s60, %s76
      %p78 = scmp.eq.s32.totalorder %s26, 0
      %p79 = por %p77, %p78
      %s81 = sadd.s32 %s80, 1
      %p84 = scmp.eq.s32.totalorder %s20, 3
      %p85 = scmp.ne.s32.totalorder %s80, %s82
      %p86 = scmp.eq.s32.totalorder %s20, 0
      %p87 = por %p85, %p86
      %p88 = scmp.ne.s32.totalorder %s80, %s82
      %p89 = scmp.eq.s32.totalorder %s25, 3
      %p90 = por %p88, %p89
      %p91 = scmp.ne.s32.totalorder %s82, %s83
      %p92 = scmp.eq.s32.totalorder %s25, 0
      %p93 = por %p91, %p92
      %p94 = scmp.ne.s32.totalorder %s82, %s83
      %p95 = scmp.eq.s32.totalorder %s26, 3
      %p96 = por %p94, %p95
      %p98 = scmp.ne.s32.totalorder %s83, %s97
      %p99 = scmp.eq.s32.totalorder %s26, 0
      %p100 = por %p98, %p99
      %s102 = sadd.s32 %s101, 1
      %p105 = scmp.eq.s32.totalorder %s20, 3
      %p106 = scmp.ne.s32.totalorder %s101, %s103
      %p107 = scmp.eq.s32.totalorder %s20, 0
      %p108 = por %p106, %p107
      %p109 = scmp.ne.s32.totalorder %s101, %s103
      %p110 = scmp.eq.s32.totalorder %s25, 3
      %p111 = por %p109, %p110
      %p112 = scmp.ne.s32.totalorder %s103, %s104
      %p113 = scmp.eq.s32.totalorder %s25, 0
      %p114 = por %p112, %p113
      %p115 = scmp.ne.s32.totalorder %s103, %s104
      %p116 = scmp.eq.s32.totalorder %s26, 3
      %p117 = por %p115, %p116
      %p119 = scmp.ne.s32.totalorder %s104, %s118
      %p120 = scmp.eq.s32.totalorder %s26, 0
      %p121 = por %p119, %p120
      %s123 = sadd.s32 %s122, 1
      %p126 = scmp.eq.s32.totalorder %s20, 3
      %p127 = scmp.ne.s32.totalorder %s122, %s124
      %p128 = scmp.eq.s32.totalorder %s20, 0
      %p129 = por %p127, %p128
      %p130 = scmp.ne.s32.totalorder %s122, %s124
      %p131 = scmp.eq.s32.totalorder %s25, 3
      %p132 = por %p130, %p131
      %p133 = scmp.ne.s32.totalorder %s124, %s125
      %p134 = scmp.eq.s32.totalorder %s25, 0
      %p135 = por %p133, %p134
      %p136 = scmp.ne.s32.totalorder %s124, %s125
      %p137 = scmp.eq.s32.totalorder %s26, 3
      %p138 = por %p136, %p137
      %p140 = scmp.ne.s32.totalorder %s125, %s139
      %p141 = scmp.eq.s32.totalorder %s26, 0
      %p142 = por %p140, %p141
      %s143 = ssub.s32 %s20, %s27
      %p144 = scmp.eq.s32.totalorder %s143, 0
      %s146 = sadd.s32 %s145, 1
      %s147 = scalar_select %p144, %s145, %s146
      %p150 = pneg %p144
      %p151 = scmp.eq.s32.totalorder %s20, 3
      %p152 = por %p150, %p151
      %p153 = scmp.ne.s32.totalorder %s145, %s148
      %p154 = scmp.eq.s32.totalorder %s20, 0
      %p155 = por %p153, %p154
      %p156 = scmp.ne.s32.totalorder %s145, %s148
      %p157 = scmp.eq.s32.totalorder %s25, 3
      %p158 = por %p156, %p157
      %p159 = scmp.ne.s32.totalorder %s148, %s149
      %p160 = scmp.eq.s32.totalorder %s25, 0
      %p161 = por %p159, %p160
      %p162 = scmp.ne.s32.totalorder %s148, %s149
      %p163 = scmp.eq.s32.totalorder %s26, 3
      %p164 = por %p162, %p163
      %p166 = scmp.ne.s32.totalorder %s149, %s165
      %p167 = scmp.eq.s32.totalorder %s26, 0
      %p168 = por %p166, %p167
      %p169 = scmp.le.s32.totalorder 1, %s20
      %p170 = scmp.lt.s32.totalorder %s20, 5
      %p171 = pnand %p169, %p170
      %p172 = pneg %p171
      // Predicated region
      $region9: #{tpu_custom_call.1} parent=5 // pred_check
        _
      $region10: #{tpu_custom_call.1} parent=5 // pred_check_branch
        %174 = sbr.rel (%p171) target = $region12
      $region11: #{tpu_custom_call.1} parent=5 // pred_region
        %s175 = ssub.s32 %s20, 1
        // Predicated region
        $region13: #{tpu_custom_call.1} parent=11 // pred_check
          %p176 = pneg %p93
        $region14: #{tpu_custom_call.1} parent=11 // pred_check_branch
          %178 = sbr.rel (%p176) target = $region16
        $region15: #{tpu_custom_call.1} parent=11 // pred_region
          %s180 = ssub.s32 1024, 1024
          %181 = vsyncadd [#allocation6], %s180
          %s182 = sshll.u32 [#allocation7], 4
          %s183 = int_to_ptr.vmem [resolvable:$true] %s182
          %188 = dma.hbm_to_vmem [thread:$0]  %s2, 1024, %s183, [#allocation6], 64, 64, 4
        $region16: #{tpu_custom_call.1} parent=11 // pred_fallthru
          _
        // Predicated region
        $region17: #{tpu_custom_call.1} parent=11 // pred_check
          %p189 = pneg %p114
        $region18: #{tpu_custom_call.1} parent=11 // pred_check_branch
          %191 = sbr.rel (%p189) target = $region20
        $region19: #{tpu_custom_call.1} parent=11 // pred_region
          _
        $region20: #{tpu_custom_call.1} parent=11 // pred_fallthru
          _
        // Predicated region
        $region21: #{tpu_custom_call.1} parent=11 // pred_check
          %p192 = pneg %p135
        $region22: #{tpu_custom_call.1} parent=11 // pred_check_branch
          %194 = sbr.rel (%p192) target = $region24
        $region23: #{tpu_custom_call.1} parent=11 // pred_region
          _
        $region24: #{tpu_custom_call.1} parent=11 // pred_fallthru
          _
      $region12: #{tpu_custom_call.1} parent=5 // pred_fallthru
        _
      %p195 = scmp.lt.s32.totalorder %s20, 4
      // Predicated region
      $region25: #{tpu_custom_call.1} parent=5 // pred_check
        %p196 = pneg %p195
      $region26: #{tpu_custom_call.1} parent=5 // pred_check_branch
        %198 = sbr.rel (%p196) target = $region28
      $region27: #{tpu_custom_call.1} parent=5 // pred_region
        // Predicated region
        $region29: #{tpu_custom_call.1} parent=27 // pred_check
          %p199 = pneg %p40
        $region30: #{tpu_custom_call.1} parent=27 // pred_check_branch
          %201 = sbr.rel (%p199) target = $region32
        $region31: #{tpu_custom_call.1} parent=27 // pred_region
          %s202 = sand.u32 %s30, 1
          %s203 = scalar_lea.sflag [#allocation3], %s202
          %s204 = sand.u32 %s30, 1
          %s205 = smul.addr %s204, 64
          %s206 = scalar_lea.vmem [#allocation2], %s205
          %s208 = ssub.s32 1024, 1024
          %209 = vsyncadd %s203, %s208
          %s210 = smul.addr %s20, 16
          %s211 = smul.addr %s210, 64
          %s212 = scalar_lea.hbm %s0, %s211
          %s213 = sshll.u32 %s206, 4
          %s214 = int_to_ptr.vmem [resolvable:$true] %s213
          %219 = dma.hbm_to_vmem [thread:$0]  %s212, 1024, %s214, %s203, 64, 64, 4
        $region32: #{tpu_custom_call.1} parent=27 // pred_fallthru
          _
        // Predicated region
        $region33: #{tpu_custom_call.1} parent=27 // pred_check
          %p220 = pneg %p66
        $region34: #{tpu_custom_call.1} parent=27 // pred_check_branch
          %222 = sbr.rel (%p220) target = $region36
        $region35: #{tpu_custom_call.1} parent=27 // pred_region
          %s223 = sand.u32 %s20, 1
          %s224 = scalar_lea.sflag [#allocation6], %s223
          %s225 = sand.u32 %s56, 1
          %s226 = smul.addr %s225, 64
          %s227 = scalar_lea.vmem [#allocation5], %s226
          %s229 = ssub.s32 1024, 1024
          %230 = vsyncadd %s224, %s229
          %s231 = smul.addr %s20, 16
          %s232 = smul.addr %s231, 64
          %s233 = scalar_lea.hbm %s1, %s232
          %s234 = sshll.u32 %s227, 4
          %s235 = int_to_ptr.vmem [resolvable:$true] %s234
          %240 = dma.hbm_to_vmem [thread:$0]  %s233, 1024, %s235, %s224, 64, 64, 4
        $region36: #{tpu_custom_call.1} parent=27 // pred_fallthru
          _
      $region28: #{tpu_custom_call.1} parent=5 // pred_fallthru
        _
      %p241 = scmp.le.s32.totalorder 1, %s20
      %p242 = scmp.lt.s32.totalorder %s20, 5
      %p243 = pnand %p241, %p242
      %p244 = pneg %p243
      // Predicated region
      $region37: #{tpu_custom_call.1} parent=5 // pred_check
        _
      $region38: #{tpu_custom_call.1} parent=5 // pred_check_branch
        %246 = sbr.rel (%p243) target = $region40
      $region39: #{tpu_custom_call.1} parent=5 // pred_region
        %s247 = ssub.s32 %s20, 1
        %s248 = sand.u32 %s33, 1
        %s249 = scalar_lea.sflag [#allocation3], %s248
        %s250 = sand.u32 %s33, 1
        %s251 = smul.addr %s250, 64
        %s252 = scalar_lea.vmem [#allocation2], %s251
        // Predicated region
        $region41: #{tpu_custom_call.1} parent=39 // pred_check
          %p253 = pneg %p46
        $region42: #{tpu_custom_call.1} parent=39 // pred_check_branch
          %255 = sbr.rel (%p253) target = $region44
        $region43: #{tpu_custom_call.1} parent=39 // pred_region
          %256 = dma.done %s249, 1024
        $region44: #{tpu_custom_call.1} parent=39 // pred_fallthru
          _
        %s257 = sand.u32 %s25, 1
        %s258 = scalar_lea.sflag [#allocation6], %s257
        %s259 = sand.u32 %s59, 1
        %s260 = smul.addr %s259, 64
        %s261 = scalar_lea.vmem [#allocation5], %s260
        // Predicated region
        $region45: #{tpu_custom_call.1} parent=39 // pred_check
          %p262 = pneg %p72
        $region46: #{tpu_custom_call.1} parent=39 // pred_check_branch
          %264 = sbr.rel (%p262) target = $region48
        $region47: #{tpu_custom_call.1} parent=39 // pred_region
          %265 = dma.done %s258, 1024
        $region48: #{tpu_custom_call.1} parent=39 // pred_fallthru
          _
        // Predicated region
        $region49: #{tpu_custom_call.1} parent=39 // pred_check
          %p266 = pneg %p93
        $region50: #{tpu_custom_call.1} parent=39 // pred_check_branch
          %268 = sbr.rel (%p266) target = $region52
        $region51: #{tpu_custom_call.1} parent=39 // pred_region
          %269 = dma.done [#allocation6], 1024
        $region52: #{tpu_custom_call.1} parent=39 // pred_fallthru
          _
        %s270 = sand.u32 %s33, 1
        %s271 = scalar_lea.sflag [#allocation3], %s270
        %s272 = sand.u32 %s33, 1
        %s273 = smul.addr %s272, 64
        %s274 = scalar_lea.vmem [#allocation2], %s273
        %p275 = pneg %p46
        %p276 = pneg %p43
        %s277 = sand.u32 %s25, 1
        %s278 = scalar_lea.sflag [#allocation6], %s277
        %s279 = sand.u32 %s59, 1
        %s280 = smul.addr %s279, 64
        %s281 = scalar_lea.vmem [#allocation5], %s280
        %p282 = pneg %p72
        %p283 = pneg %p69
        %p284 = pneg %p93
        %p285 = pneg %p90
        %p286 = pneg %p114
        %p287 = pneg %p111
        %p288 = pneg %p135
        %p289 = pneg %p132
        %p290 = pneg %p161
        %p291 = pneg %p158
        %s292 = sand.u32 %s148, 1
        %s293 = scalar_lea.sflag [#allocation4], %s292
        %s294 = sand.u32 %s148, 1
        %s295 = smul.addr %s294, 64
        %s296 = scalar_lea.vmem [#allocation8], %s295
        %v297 = vld [vmem:[%s252] sm:$0xf]
        %v298 = vld [vmem:[%s252 + $0x4] sm:$0xf]
        %v299 = vld [vmem:[%s252 + $0x8] sm:$0xf]
        %v300 = vld [vmem:[%s252 + $0xc] sm:$0xf]
        %v301 = vld [vmem:[%s252 + $0x10] sm:$0xf]
        %v302 = vld [vmem:[%s252 + $0x14] sm:$0xf]
        %v303 = vld [vmem:[%s252 + $0x18] sm:$0xf]
        %v304 = vld [vmem:[%s252 + $0x1c] sm:$0xf]
        %v305 = vld [vmem:[%s252 + $0x20] sm:$0xf]
        %v306 = vld [vmem:[%s252 + $0x24] sm:$0xf]
        %v307 = vld [vmem:[%s252 + $0x28] sm:$0xf]
        %v308 = vld [vmem:[%s252 + $0x2c] sm:$0xf]
        %v309 = vld [vmem:[%s252 + $0x30] sm:$0xf]
        %v310 = vld [vmem:[%s252 + $0x34] sm:$0xf]
        %v311 = vld [vmem:[%s252 + $0x38] sm:$0xf]
        %v312 = vld [vmem:[%s252 + $0x3c] sm:$0xf]
        %v313 = vunpack.c.l.bf16 %v297
        %v314 = vunpack.c.l.bf16 %v298
        %v315 = vunpack.c.l.bf16 %v299
        %v316 = vunpack.c.l.bf16 %v300
        %v317 = vunpack.c.l.bf16 %v301
        %v318 = vunpack.c.l.bf16 %v302
        %v319 = vunpack.c.l.bf16 %v303
        %v320 = vunpack.c.l.bf16 %v304
        %v321 = vunpack.c.l.bf16 %v305
        %v322 = vunpack.c.l.bf16 %v306
        %v323 = vunpack.c.l.bf16 %v307
        %v324 = vunpack.c.l.bf16 %v308
        %v325 = vunpack.c.l.bf16 %v309
        %v326 = vunpack.c.l.bf16 %v310
        %v327 = vunpack.c.l.bf16 %v311
        %v328 = vunpack.c.l.bf16 %v312
        %v329 = vld [vmem:[%s261] sm:$0xf]
        %v330 = vld [vmem:[%s261 + $0x4] sm:$0xf]
        %v331 = vld [vmem:[%s261 + $0x8] sm:$0xf]
        %v332 = vld [vmem:[%s261 + $0xc] sm:$0xf]
        %v333 = vld [vmem:[%s261 + $0x10] sm:$0xf]
        %v334 = vld [vmem:[%s261 + $0x14] sm:$0xf]
        %v335 = vld [vmem:[%s261 + $0x18] sm:$0xf]
        %v336 = vld [vmem:[%s261 + $0x1c] sm:$0xf]
        %v337 = vld [vmem:[%s261 + $0x20] sm:$0xf]
        %v338 = vld [vmem:[%s261 + $0x24] sm:$0xf]
        %v339 = vld [vmem:[%s261 + $0x28] sm:$0xf]
        %v340 = vld [vmem:[%s261 + $0x2c] sm:$0xf]
        %v341 = vld [vmem:[%s261 + $0x30] sm:$0xf]
        %v342 = vld [vmem:[%s261 + $0x34] sm:$0xf]
        %v343 = vld [vmem:[%s261 + $0x38] sm:$0xf]
        %v344 = vld [vmem:[%s261 + $0x3c] sm:$0xf]
        %v345 = vunpack.c.l.bf16 %v329
        %v346 = vunpack.c.l.bf16 %v330
        %v347 = vunpack.c.l.bf16 %v331
        %v348 = vunpack.c.l.bf16 %v332
        %v349 = vunpack.c.l.bf16 %v333
        %v350 = vunpack.c.l.bf16 %v334
        %v351 = vunpack.c.l.bf16 %v335
        %v352 = vunpack.c.l.bf16 %v336
        %v353 = vunpack.c.l.bf16 %v337
        %v354 = vunpack.c.l.bf16 %v338
        %v355 = vunpack.c.l.bf16 %v339
        %v356 = vunpack.c.l.bf16 %v340
        %v357 = vunpack.c.l.bf16 %v341
        %v358 = vunpack.c.l.bf16 %v342
        %v359 = vunpack.c.l.bf16 %v343
        %v360 = vunpack.c.l.bf16 %v344
        %v361 = vadd.f32 %v313, %v345
        %v362 = vadd.f32 %v314, %v346
        %v363 = vadd.f32 %v315, %v347
        %v364 = vadd.f32 %v316, %v348
        %v365 = vadd.f32 %v317, %v349
        %v366 = vadd.f32 %v318, %v350
        %v367 = vadd.f32 %v319, %v351
        %v368 = vadd.f32 %v320, %v352
        %v369 = vadd.f32 %v321, %v353
        %v370 = vadd.f32 %v322, %v354
        %v371 = vadd.f32 %v323, %v355
        %v372 = vadd.f32 %v324, %v356
        %v373 = vadd.f32 %v325, %v357
        %v374 = vadd.f32 %v326, %v358
        %v375 = vadd.f32 %v327, %v359
        %v376 = vadd.f32 %v328, %v360
        %v377 = vld [vmem:[#allocation7] sm:$0xf]
        %v378 = vld [vmem:[#allocation7 + $0x4] sm:$0xf]
        %v379 = vld [vmem:[#allocation7 + $0x8] sm:$0xf]
        %v380 = vld [vmem:[#allocation7 + $0xc] sm:$0xf]
        %v381 = vld [vmem:[#allocation7 + $0x10] sm:$0xf]
        %v382 = vld [vmem:[#allocation7 + $0x14] sm:$0xf]
        %v383 = vld [vmem:[#allocation7 + $0x18] sm:$0xf]
        %v384 = vld [vmem:[#allocation7 + $0x1c] sm:$0xf]
        %v385 = vld [vmem:[#allocation7 + $0x20] sm:$0xf]
        %v386 = vld [vmem:[#allocation7 + $0x24] sm:$0xf]
        %v387 = vld [vmem:[#allocation7 + $0x28] sm:$0xf]
        %v388 = vld [vmem:[#allocation7 + $0x2c] sm:$0xf]
        %v389 = vld [vmem:[#allocation7 + $0x30] sm:$0xf]
        %v390 = vld [vmem:[#allocation7 + $0x34] sm:$0xf]
        %v391 = vld [vmem:[#allocation7 + $0x38] sm:$0xf]
        %v392 = vld [vmem:[#allocation7 + $0x3c] sm:$0xf]
        %v393 = vunpack.c.l.bf16 %v377
        %v394 = vunpack.c.l.bf16 %v378
        %v395 = vunpack.c.l.bf16 %v379
        %v396 = vunpack.c.l.bf16 %v380
        %v397 = vunpack.c.l.bf16 %v381
        %v398 = vunpack.c.l.bf16 %v382
        %v399 = vunpack.c.l.bf16 %v383
        %v400 = vunpack.c.l.bf16 %v384
        %v401 = vunpack.c.l.bf16 %v385
        %v402 = vunpack.c.l.bf16 %v386
        %v403 = vunpack.c.l.bf16 %v387
        %v404 = vunpack.c.l.bf16 %v388
        %v405 = vunpack.c.l.bf16 %v389
        %v406 = vunpack.c.l.bf16 %v390
        %v407 = vunpack.c.l.bf16 %v391
        %v408 = vunpack.c.l.bf16 %v392
        %v409 = vadd.f32 %v361, %v393
        %v410 = vadd.f32 %v362, %v394
        %v411 = vadd.f32 %v363, %v395
        %v412 = vadd.f32 %v364, %v396
        %v413 = vadd.f32 %v365, %v397
        %v414 = vadd.f32 %v366, %v398
        %v415 = vadd.f32 %v367, %v399
        %v416 = vadd.f32 %v368, %v400
        %v417 = vadd.f32 %v369, %v401
        %v418 = vadd.f32 %v370, %v402
        %v419 = vadd.f32 %v371, %v403
        %v420 = vadd.f32 %v372, %v404
        %v421 = vadd.f32 %v373, %v405
        %v422 = vadd.f32 %v374, %v406
        %v423 = vadd.f32 %v375, %v407
        %v424 = vadd.f32 %v376, %v408
        %425 = vadd.xlane.f32.xlu0 %v409
        %v426 = vpop.xlane.xlu0 %425
        %427 = vadd.xlane.f32.xlu0 %v410
        %v428 = vpop.xlane.xlu0 %427
        %429 = vadd.xlane.f32.xlu0 %v411
        %v430 = vpop.xlane.xlu0 %429
        %431 = vadd.xlane.f32.xlu0 %v412
        %v432 = vpop.xlane.xlu0 %431
        %433 = vadd.xlane.f32.xlu0 %v413
        %v434 = vpop.xlane.xlu0 %433
        %435 = vadd.xlane.f32.xlu0 %v414
        %v436 = vpop.xlane.xlu0 %435
        %437 = vadd.xlane.f32.xlu0 %v415
        %v438 = vpop.xlane.xlu0 %437
        %439 = vadd.xlane.f32.xlu0 %v416
        %v440 = vpop.xlane.xlu0 %439
        %441 = vadd.xlane.f32.xlu0 %v417
        %v442 = vpop.xlane.xlu0 %441
        %443 = vadd.xlane.f32.xlu0 %v418
        %v444 = vpop.xlane.xlu0 %443
        %445 = vadd.xlane.f32.xlu0 %v419
        %v446 = vpop.xlane.xlu0 %445
        %447 = vadd.xlane.f32.xlu0 %v420
        %v448 = vpop.xlane.xlu0 %447
        %449 = vadd.xlane.f32.xlu0 %v421
        %v450 = vpop.xlane.xlu0 %449
        %451 = vadd.xlane.f32.xlu0 %v422
        %v452 = vpop.xlane.xlu0 %451
        %453 = vadd.xlane.f32.xlu0 %v423
        %v454 = vpop.xlane.xlu0 %453
        %455 = vadd.xlane.f32.xlu0 %v424
        %v456 = vpop.xlane.xlu0 %455
        %v457 = vrcp.pop 128.0
        %v458 = vmul.f32 %v426, %v457
        %v459 = vmul.f32 %v428, %v457
        %v460 = vmul.f32 %v430, %v457
        %v461 = vmul.f32 %v432, %v457
        %v462 = vmul.f32 %v434, %v457
        %v463 = vmul.f32 %v436, %v457
        %v464 = vmul.f32 %v438, %v457
        %v465 = vmul.f32 %v440, %v457
        %v466 = vmul.f32 %v442, %v457
        %v467 = vmul.f32 %v444, %v457
        %v468 = vmul.f32 %v446, %v457
        %v469 = vmul.f32 %v448, %v457
        %v470 = vmul.f32 %v450, %v457
        %v471 = vmul.f32 %v452, %v457
        %v472 = vmul.f32 %v454, %v457
        %v473 = vmul.f32 %v456, %v457
        %v474 = vsub.f32 %v409, %v458
        %v475 = vsub.f32 %v410, %v459
        %v476 = vsub.f32 %v411, %v460
        %v477 = vsub.f32 %v412, %v461
        %v478 = vsub.f32 %v413, %v462
        %v479 = vsub.f32 %v414, %v463
        %v480 = vsub.f32 %v415, %v464
        %v481 = vsub.f32 %v416, %v465
        %v482 = vsub.f32 %v417, %v466
        %v483 = vsub.f32 %v418, %v467
        %v484 = vsub.f32 %v419, %v468
        %v485 = vsub.f32 %v420, %v469
        %v486 = vsub.f32 %v421, %v470
        %v487 = vsub.f32 %v422, %v471
        %v488 = vsub.f32 %v423, %v472
        %v489 = vsub.f32 %v424, %v473
        %v490 = vmul.f32 %v474, %v474
        %v491 = vmul.f32 %v475, %v475
        %v492 = vmul.f32 %v476, %v476
        %v493 = vmul.f32 %v477, %v477
        %v494 = vmul.f32 %v478, %v478
        %v495 = vmul.f32 %v479, %v479
        %v496 = vmul.f32 %v480, %v480
        %v497 = vmul.f32 %v481, %v481
        %v498 = vmul.f32 %v482, %v482
        %v499 = vmul.f32 %v483, %v483
        %v500 = vmul.f32 %v484, %v484
        %v501 = vmul.f32 %v485, %v485
        %v502 = vmul.f32 %v486, %v486
        %v503 = vmul.f32 %v487, %v487
        %v504 = vmul.f32 %v488, %v488
        %v505 = vmul.f32 %v489, %v489
        %506 = vadd.xlane.f32.xlu0 %v490
        %v507 = vpop.xlane.xlu0 %506
        %508 = vadd.xlane.f32.xlu0 %v491
        %v509 = vpop.xlane.xlu0 %508
        %510 = vadd.xlane.f32.xlu0 %v492
        %v511 = vpop.xlane.xlu0 %510
        %512 = vadd.xlane.f32.xlu0 %v493
        %v513 = vpop.xlane.xlu0 %512
        %514 = vadd.xlane.f32.xlu0 %v494
        %v515 = vpop.xlane.xlu0 %514
        %516 = vadd.xlane.f32.xlu0 %v495
        %v517 = vpop.xlane.xlu0 %516
        %518 = vadd.xlane.f32.xlu0 %v496
        %v519 = vpop.xlane.xlu0 %518
        %520 = vadd.xlane.f32.xlu0 %v497
        %v521 = vpop.xlane.xlu0 %520
        %522 = vadd.xlane.f32.xlu0 %v498
        %v523 = vpop.xlane.xlu0 %522
        %524 = vadd.xlane.f32.xlu0 %v499
        %v525 = vpop.xlane.xlu0 %524
        %526 = vadd.xlane.f32.xlu0 %v500
        %v527 = vpop.xlane.xlu0 %526
        %528 = vadd.xlane.f32.xlu0 %v501
        %v529 = vpop.xlane.xlu0 %528
        %530 = vadd.xlane.f32.xlu0 %v502
        %v531 = vpop.xlane.xlu0 %530
        %532 = vadd.xlane.f32.xlu0 %v503
        %v533 = vpop.xlane.xlu0 %532
        %534 = vadd.xlane.f32.xlu0 %v504
        %v535 = vpop.xlane.xlu0 %534
        %536 = vadd.xlane.f32.xlu0 %v505
        %v537 = vpop.xlane.xlu0 %536
        %v538 = vmul.f32 %v507, %v457
        %v539 = vmul.f32 %v509, %v457
        %v540 = vmul.f32 %v511, %v457
        %v541 = vmul.f32 %v513, %v457
        %v542 = vmul.f32 %v515, %v457
        %v543 = vmul.f32 %v517, %v457
        %v544 = vmul.f32 %v519, %v457
        %v545 = vmul.f32 %v521, %v457
        %v546 = vmul.f32 %v523, %v457
        %v547 = vmul.f32 %v525, %v457
        %v548 = vmul.f32 %v527, %v457
        %v549 = vmul.f32 %v529, %v457
        %v550 = vmul.f32 %v531, %v457
        %v551 = vmul.f32 %v533, %v457
        %v552 = vmul.f32 %v535, %v457
        %v553 = vmul.f32 %v537, %v457
        %v554 = vadd.f32 %v538, 1e-12
        %v555 = vadd.f32 %v539, 1e-12
        %v556 = vadd.f32 %v540, 1e-12
        %v557 = vadd.f32 %v541, 1e-12
        %v558 = vadd.f32 %v542, 1e-12
        %v559 = vadd.f32 %v543, 1e-12
        %v560 = vadd.f32 %v544, 1e-12
        %v561 = vadd.f32 %v545, 1e-12
        %v562 = vadd.f32 %v546, 1e-12
        %v563 = vadd.f32 %v547, 1e-12
        %v564 = vadd.f32 %v548, 1e-12
        %v565 = vadd.f32 %v549, 1e-12
        %v566 = vadd.f32 %v550, 1e-12
        %v567 = vadd.f32 %v551, 1e-12
        %v568 = vadd.f32 %v552, 1e-12
        %v569 = vadd.f32 %v553, 1e-12
        %v570 = vrsqrt.pop %v554
        %v571 = vrsqrt.pop %v555
        %v572 = vrsqrt.pop %v556
        %v573 = vrsqrt.pop %v557
        %v574 = vrsqrt.pop %v558
        %v575 = vrsqrt.pop %v559
        %v576 = vrsqrt.pop %v560
        %v577 = vrsqrt.pop %v561
        %v578 = vrsqrt.pop %v562
        %v579 = vrsqrt.pop %v563
        %v580 = vrsqrt.pop %v564
        %v581 = vrsqrt.pop %v565
        %v582 = vrsqrt.pop %v566
        %v583 = vrsqrt.pop %v567
        %v584 = vrsqrt.pop %v568
        %v585 = vrsqrt.pop %v569
        %v586 = vmul.f32 %v474, %v570
        %v587 = vmul.f32 %v475, %v571
        %v588 = vmul.f32 %v476, %v572
        %v589 = vmul.f32 %v477, %v573
        %v590 = vmul.f32 %v478, %v574
        %v591 = vmul.f32 %v479, %v575
        %v592 = vmul.f32 %v480, %v576
        %v593 = vmul.f32 %v481, %v577
        %v594 = vmul.f32 %v482, %v578
        %v595 = vmul.f32 %v483, %v579
        %v596 = vmul.f32 %v484, %v580
        %v597 = vmul.f32 %v485, %v581
        %v598 = vmul.f32 %v486, %v582
        %v599 = vmul.f32 %v487, %v583
        %v600 = vmul.f32 %v488, %v584
        %v601 = vmul.f32 %v489, %v585
        %v602 = vld [vmem:[%s3] sm:$0x1]
        %v604 = vlaneseq
        %v605 = vshrl.u32 %v604, 7
        %v606 = vsub.s32 0, %v605
        %v607 = vrot.slane %v602, %v606
        %v609 = vmul.f32 %v586, %v607
        %v610 = vmul.f32 %v587, %v607
        %v611 = vmul.f32 %v588, %v607
        %v612 = vmul.f32 %v589, %v607
        %v613 = vmul.f32 %v590, %v607
        %v614 = vmul.f32 %v591, %v607
        %v615 = vmul.f32 %v592, %v607
        %v616 = vmul.f32 %v593, %v607
        %v617 = vmul.f32 %v594, %v607
        %v618 = vmul.f32 %v595, %v607
        %v619 = vmul.f32 %v596, %v607
        %v620 = vmul.f32 %v597, %v607
        %v621 = vmul.f32 %v598, %v607
        %v622 = vmul.f32 %v599, %v607
        %v623 = vmul.f32 %v600, %v607
        %v624 = vmul.f32 %v601, %v607
        %v625 = vld [vmem:[%s4] sm:$0x1]
        %v627 = vlaneseq
        %v628 = vshrl.u32 %v627, 7
        %v629 = vsub.s32 0, %v628
        %v630 = vrot.slane %v625, %v629
        %v632 = vadd.f32 %v609, %v630
        %v633 = vadd.f32 %v610, %v630
        %v634 = vadd.f32 %v611, %v630
        %v635 = vadd.f32 %v612, %v630
        %v636 = vadd.f32 %v613, %v630
        %v637 = vadd.f32 %v614, %v630
        %v638 = vadd.f32 %v615, %v630
        %v639 = vadd.f32 %v616, %v630
        %v640 = vadd.f32 %v617, %v630
        %v641 = vadd.f32 %v618, %v630
        %v642 = vadd.f32 %v619, %v630
        %v643 = vadd.f32 %v620, %v630
        %v644 = vadd.f32 %v621, %v630
        %v645 = vadd.f32 %v622, %v630
        %v646 = vadd.f32 %v623, %v630
        %v647 = vadd.f32 %v624, %v630
        %v648 = vpack.c.bf16 %v633, %v632
        %v649 = vpack.c.bf16 %v635, %v634
        %v650 = vpack.c.bf16 %v637, %v636
        %v651 = vpack.c.bf16 %v639, %v638
        %v652 = vpack.c.bf16 %v641, %v640
        %v653 = vpack.c.bf16 %v643, %v642
        %v654 = vpack.c.bf16 %v645, %v644
        %v655 = vpack.c.bf16 %v647, %v646
        %v664 = vunpack.c.l.b16 %v648
        %v665 = vunpack.c.h.b16 %v648
        %v666 = vunpack.c.l.b16 %v649
        %v667 = vunpack.c.h.b16 %v649
        %v668 = vunpack.c.l.b16 %v650
        %v669 = vunpack.c.h.b16 %v650
        %v670 = vunpack.c.l.b16 %v651
        %v671 = vunpack.c.h.b16 %v651
        %v672 = vunpack.c.l.b16 %v652
        %v673 = vunpack.c.h.b16 %v652
        %v674 = vunpack.c.l.b16 %v653
        %v675 = vunpack.c.h.b16 %v653
        %v676 = vunpack.c.l.b16 %v654
        %v677 = vunpack.c.h.b16 %v654
        %v678 = vunpack.c.l.b16 %v655
        %v679 = vunpack.c.h.b16 %v655
        %v680 = vpack.c.b16 %v664, %v664
        %v681 = vpack.c.b16 %v665, %v665
        %v682 = vpack.c.b16 %v666, %v666
        %v683 = vpack.c.b16 %v667, %v667
        %v684 = vpack.c.b16 %v668, %v668
        %v685 = vpack.c.b16 %v669, %v669
        %v686 = vpack.c.b16 %v670, %v670
        %v687 = vpack.c.b16 %v671, %v671
        %v688 = vpack.c.b16 %v672, %v672
        %v689 = vpack.c.b16 %v673, %v673
        %v690 = vpack.c.b16 %v674, %v674
        %v691 = vpack.c.b16 %v675, %v675
        %v692 = vpack.c.b16 %v676, %v676
        %v693 = vpack.c.b16 %v677, %v677
        %v694 = vpack.c.b16 %v678, %v678
        %v695 = vpack.c.b16 %v679, %v679
        %712 = vst [vmem:[%s296] sm:$0xf] %v680
        %713 = vst [vmem:[%s296 + $0x4] sm:$0xf] %v681
        %714 = vst [vmem:[%s296 + $0x8] sm:$0xf] %v682
        %715 = vst [vmem:[%s296 + $0xc] sm:$0xf] %v683
        %716 = vst [vmem:[%s296 + $0x10] sm:$0xf] %v684
        %717 = vst [vmem:[%s296 + $0x14] sm:$0xf] %v685
        %718 = vst [vmem:[%s296 + $0x18] sm:$0xf] %v686
        %719 = vst [vmem:[%s296 + $0x1c] sm:$0xf] %v687
        %720 = vst [vmem:[%s296 + $0x20] sm:$0xf] %v688
        %721 = vst [vmem:[%s296 + $0x24] sm:$0xf] %v689
        %722 = vst [vmem:[%s296 + $0x28] sm:$0xf] %v690
        %723 = vst [vmem:[%s296 + $0x2c] sm:$0xf] %v691
        %724 = vst [vmem:[%s296 + $0x30] sm:$0xf] %v692
        %725 = vst [vmem:[%s296 + $0x34] sm:$0xf] %v693
        %726 = vst [vmem:[%s296 + $0x38] sm:$0xf] %v694
        %727 = vst [vmem:[%s296 + $0x3c] sm:$0xf] %v695
        %s728 = sand.u32 %s148, 1
        %s729 = scalar_lea.sflag [#allocation4], %s728
        %s730 = sand.u32 %s148, 1
        %s731 = smul.addr %s730, 64
        %s732 = scalar_lea.vmem [#allocation8], %s731
        // Predicated region
        $region53: #{tpu_custom_call.1} parent=39 // pred_check
          %p733 = pneg %p158
        $region54: #{tpu_custom_call.1} parent=39 // pred_check_branch
          %735 = sbr.rel (%p733) target = $region56
        $region55: #{tpu_custom_call.1} parent=39 // pred_region
          %s737 = ssub.s32 1024, 1024
          %738 = vsyncadd %s729, %s737
          %s739 = smul.addr %s25, 16
          %s740 = smul.addr %s739, 64
          %s741 = scalar_lea.hbm %s5, %s740
          %s742 = sshll.u32 %s732, 4
          %s743 = int_to_ptr.vmem [resolvable:$true] %s742
          %748 = dma.vmem_to_hbm [thread:$0]  %s743, 1024, %s741, %s729, 64, 64, 4
        $region56: #{tpu_custom_call.1} parent=39 // pred_fallthru
          _
      $region40: #{tpu_custom_call.1} parent=5 // pred_fallthru
        _
      %p749 = scmp.le.s32.totalorder 2, %s20
      // Predicated region
      $region57: #{tpu_custom_call.1} parent=5 // pred_check
        %p750 = pneg %p749
      $region58: #{tpu_custom_call.1} parent=5 // pred_check_branch
        %752 = sbr.rel (%p750) target = $region60
      $region59: #{tpu_custom_call.1} parent=5 // pred_region
        %s753 = ssub.s32 %s20, 2
        // Predicated region
        $region61: #{tpu_custom_call.1} parent=59 // pred_check
          %p754 = pneg %p164
        $region62: #{tpu_custom_call.1} parent=59 // pred_check_branch
          %756 = sbr.rel (%p754) target = $region64
        $region63: #{tpu_custom_call.1} parent=59 // pred_region
          %s757 = sand.u32 %s149, 1
          %s758 = scalar_lea.sflag [#allocation4], %s757
          %s759 = sand.u32 %s149, 1
          %s760 = smul.addr %s759, 64
          %s761 = scalar_lea.vmem [#allocation8], %s760
          %762 = dma.done %s758, 1024
        $region64: #{tpu_custom_call.1} parent=59 // pred_fallthru
          _
      $region60: #{tpu_custom_call.1} parent=5 // pred_fallthru
        _
    $region6: #{tpu_custom_call.1} parent=1 // loop_footer
      %s24 = sadd.s32 1, %s20
    $region7: #{tpu_custom_call.1} parent=1 // loop_footer_branch
      %19 = sbr.rel target = $region3
    $region8: #{tpu_custom_call.1} parent=1 // loop_exit
      _
    %763 = vsyncpa [#allocation3], 1
    %s764 = scalar_lea.sflag [#allocation3], 1
    %765 = vsyncpa %s764, 1
    %766 = vsyncpa [#allocation6], 1
    %s767 = scalar_lea.sflag [#allocation6], 1
    %768 = vsyncpa %s767, 1
    %769 = vsyncpa [#allocation4], 1
    %s770 = scalar_lea.sflag [#allocation4], 1
    %771 = vsyncpa %s770, 1

</llo_original>
